<compile_context>
chip_gen: v6e
topology: v6e:2x2x1
jax: 0.10.0
libtpu: 0.0.40
codegen_flags: <defaults>
</compile_context>

<pallas_src>
import jax
import jax.numpy as jnp
from jax.experimental import pallas as pl
from jax.experimental.pallas import tpu as pltpu


def _round_up(v, m):
    return (v + m - 1) // m * m


def _vmem_capacity_bytes():
    """Physical VMEM per TensorCore; conservative 64 MiB (v7x) fallback."""
    try:
        info = pltpu.get_tpu_info()
        for name in ("vmem_capacity_bytes", "vmem_bytes", "vmem_size_bytes"):
            cap = getattr(info, name, None)
            if cap:
                return int(cap)
    except Exception:
        pass
    return 64 * 1024 * 1024


def hybrid_embed_kernel(patches_ref, w_conv_ref, b_conv_ref,
                        w_proj_ref, b_proj_ref, out_ref):
    # patches_ref: (1, TM, K1p) bf16     K1p = round_up(C*p*p, 128)
    # w_conv_ref : (K1p, Fp) bf16        b_conv_ref: (1, Fp) f32
    # w_proj_ref : (Fp, Ep)  bf16        b_proj_ref: (1, Ep) f32
    # out_ref    : (1, TM, Ep) out_dtype
    patches = patches_ref[0]                                    # (TM, K1p) bf16
    feat = jnp.dot(patches, w_conv_ref[...],
                   preferred_element_type=jnp.float32)          # (TM, Fp) f32 acc
    feat = (feat + b_conv_ref[...]).astype(jnp.bfloat16)        # fp32 bias, bf16 value
    out = jnp.dot(feat, w_proj_ref[...],
                  preferred_element_type=jnp.float32)           # (TM, Ep) f32 acc
    out = out + b_proj_ref[...]                                 # fp32 bias
    out_ref[0] = out.astype(out_ref.dtype)


def hybrid_embed(x, w_conv, b_conv, w_proj, b_proj, patch, out_dtype=None):
    """x: (B, C, H, W).  Returns (B, N, E) with N = (H//p)*(W//p)."""
    B, C, H, W = x.shape
    p = patch
    Hf, Wf = H // p, W // p
    N = Hf * Wf
    K1 = C * p * p
    F = w_conv.shape[1]
    E = w_proj.shape[1]
    out_dtype = x.dtype if out_dtype is None else jnp.dtype(out_dtype)
    out_itemsize = jnp.dtype(out_dtype).itemsize

    # Lane-dense padded widths (multiples of 128) for every MXU / store dim.
    K1p = _round_up(K1, 128)
    Fp = _round_up(F, 128)
    Ep = _round_up(E, 128)

    # ---- VMEM-budgeted tile selection ------------------------------------
    vmem_cap = _vmem_capacity_bytes()
    # Single-buffered weights + biases are resident for the whole grid.
    weight_bytes = K1p * Fp * 2 + Fp * 4 + Fp * Ep * 2 + Ep * 4

    def footprint(tm):
        return (weight_bytes
                + 2 * tm * K1p * 2              # double-buffered patches tile (bf16)
                + 2 * tm * Ep * out_itemsize)   # double-buffered output tile

    budget = vmem_cap // 2
    # v5e/v6e (128 MiB VMEM): TM up to 512 (roofline sweet spot);
    # v7x (64 MiB VMEM, 2.3x HBM BW): cap at 256.
    max_tm = 512 if vmem_cap >= (96 << 20) else 256
    N8 = _round_up(N, 8)
    TM = 8
    for t in (512, 256, 128, 64, 32, 16, 8):
        if t <= max_tm and t <= N8 and footprint(t) <= budget:
            TM = t
            break
    # v7x has 2 TensorCores: guarantee >= 2 grid cells when B == 1.
    if B == 1 and _round_up(N, TM) // TM < 2 and TM > 8:
        TM = max(8, TM // 2)

    N_pad = _round_up(N, TM)
    n_tiles = N_pad // TM

    # im2col glue (reshape/transpose): (B, N, C*p*p), inner order (c, kh, kw) —
    # identical patch order to backbone(x).flatten(2).transpose(1, 2).
    patches = x.reshape(B, C, Hf, p, Wf, p)
    patches = patches.transpose(0, 2, 4, 1, 3, 5).reshape(B, N, K1)
    if N_pad != N or K1p != K1:
        patches = jnp.pad(patches, ((0, 0), (0, N_pad - N), (0, K1p - K1)))
    patches = patches.astype(jnp.bfloat16)

    # Zero-padded, pre-cast weights (bf16 MXU operands, fp32 biases).
    w_conv_p = jnp.pad(w_conv, ((0, K1p - K1), (0, Fp - F))).astype(jnp.bfloat16)
    b_conv_p = jnp.pad(b_conv, (0, Fp - F)).reshape(1, Fp).astype(jnp.float32)
    w_proj_p = jnp.pad(w_proj, ((0, Fp - F), (0, Ep - E))).astype(jnp.bfloat16)
    b_proj_p = jnp.pad(b_proj, (0, Ep - E)).reshape(1, Ep).astype(jnp.float32)

    vmem_limit = int(min(max(footprint(TM) * 1.5 + (4 << 20), 32 << 20),
                         vmem_cap * 0.9))

    const = pl.Buffered(1)  # constant blocks: never re-fetched, single buffer
    out = pl.pallas_call(
        hybrid_embed_kernel,
        out_shape=jax.ShapeDtypeStruct((B, N_pad, Ep), out_dtype),
        grid_spec=pltpu.PrefetchScalarGridSpec(
            num_scalar_prefetch=0,
            grid=(B, n_tiles),
            in_specs=[
                pl.BlockSpec((1, TM, K1p), lambda b, i: (b, i, 0)),
                pl.BlockSpec((K1p, Fp), lambda b, i: (0, 0), pipeline_mode=const),
                pl.BlockSpec((1, Fp), lambda b, i: (0, 0), pipeline_mode=const),
                pl.BlockSpec((Fp, Ep), lambda b, i: (0, 0), pipeline_mode=const),
                pl.BlockSpec((1, Ep), lambda b, i: (0, 0), pipeline_mode=const),
            ],
            out_specs=pl.BlockSpec((1, TM, Ep), lambda b, i: (b, i, 0)),
        ),
        compiler_params=pltpu.CompilerParams(
            dimension_semantics=("parallel", "parallel"),
            allow_input_fusion=[True, False, False, False, False],
            vmem_limit_bytes=vmem_limit,
        ),
    )(patches, w_conv_p, b_conv_p, w_proj_p, b_proj_p)

    # Slice off padding only when padding actually happened (E=768/1024 and
    # TM-aligned N hit the no-copy fast path).
    if Ep != E or N_pad != N:
        out = out[:, :N, :E]
    return out


def hybrid_embed_ref(x, w_conv, b_conv, w_proj, b_proj, patch):
    """Plain-JAX fp32 reference mirroring the PyTorch forward."""
    B, C, H, W = x.shape
    p = patch
    Hf, Wf = H // p, W // p
    patches = x.reshape(B, C, Hf, p, Wf, p).transpose(0, 2, 4, 1, 3, 5)
    patches = patches.reshape(B, Hf * Wf, C * p * p)
    feat = patches @ w_conv + b_conv          # backbone output, already (B, N, F)
    return feat @ w_proj + b_proj             # proj(flatten(2).transpose(1,2))


if __name__ == "__main__":
    key = jax.random.PRNGKey(0)
    k_x, k_wc, k_bc, k_wp, k_bp = jax.random.split(key, 5)

    # small shapes: batch=2, in_chans=4, img=16x16, patch=4 -> feature 4x4 (N=16)
    B, C, H, W = 2, 4, 16, 16
    patch = 4
    feature_dim = 32
    embed_dim = 64
    K1 = C * patch * patch
    N = (H // patch) * (W // patch)

    x = jax.random.normal(k_x, (B, C, H, W), dtype=jnp.float32)
    # synthetic backbone conv weight (F, C, p, p) flattened to (C*p*p, F)
    w_conv = jax.random.normal(k_wc, (K1, feature_dim), dtype=jnp.float32) * 0.05
    b_conv = jax.random.normal(k_bc, (feature_dim,), dtype=jnp.float32) * 0.05
    # nn.Linear(feature_dim, embed_dim): torch stores (embed_dim, feature_dim);
    # kept pre-transposed (feature_dim, embed_dim) for the matmul.
    w_proj = jax.random.normal(k_wp, (feature_dim, embed_dim), dtype=jnp.float32) * 0.05
    b_proj = jax.random.normal(k_bp, (embed_dim,), dtype=jnp.float32) * 0.05

    run = jax.jit(hybrid_embed, static_argnames=("patch", "out_dtype"))
    out = run(x, w_conv, b_conv, w_proj, b_proj, patch=patch)
    out = jax.block_until_ready(out)

    ref = hybrid_embed_ref(x, w_conv, b_conv, w_proj, b_proj, patch)
    assert out.shape == (B, N, embed_dim)
    # bf16 MXU operands (fp32 accumulation) -> looser tolerance vs fp32 reference.
    assert jnp.allclose(out, ref, atol=3e-2, rtol=3e-2), float(
        jnp.max(jnp.abs(out - ref)))

    print("KERNEL_OK")
</pallas_src>

<mosaic_0001>
module attributes {stable_mosaic.version = 11 : i64} {
  func.func @hybrid_embed_kernel(%arg0: i32, %arg1: i32, %arg2: memref<1x16x128xbf16, #tpu.memory_space<vmem>>, %arg3: memref<128x128xbf16, #tpu.memory_space<vmem>>, %arg4: memref<1x128xf32, #tpu.memory_space<vmem>>, %arg5: memref<128x128xbf16, #tpu.memory_space<vmem>>, %arg6: memref<1x128xf32, #tpu.memory_space<vmem>>, %arg7: memref<1x16x128xf32, #tpu.memory_space<vmem>>) attributes {dimension_semantics = [#tpu.dimension_semantics<parallel>, #tpu.dimension_semantics<parallel>], iteration_bounds = array<i64: 2, 1>, scalar_prefetch = 0 : i64, scratch_operands = 0 : i64, tpu.core_type = #tpu.core_type<tc>, window_params = [{transform_indices = @transform_0, window_bounds = array<i64: 1, 16, 128>}, {pipeline_mode = #tpu.pipeline_mode<synchronous>, transform_indices = @transform_1, window_bounds = array<i64: 128, 128>}, {pipeline_mode = #tpu.pipeline_mode<synchronous>, transform_indices = @transform_2, window_bounds = array<i64: 1, 128>}, {pipeline_mode = #tpu.pipeline_mode<synchronous>, transform_indices = @transform_3, window_bounds = array<i64: 128, 128>}, {pipeline_mode = #tpu.pipeline_mode<synchronous>, transform_indices = @transform_4, window_bounds = array<i64: 1, 128>}, {transform_indices = @transform_5, window_bounds = array<i64: 1, 16, 128>}]} {
    %c0 = arith.constant 0 : index
    %c0_0 = arith.constant 0 : index
    %c0_1 = arith.constant 0 : index
    %0 = vector.load %arg2[%c0, %c0_0, %c0_1] : memref<1x16x128xbf16, #tpu.memory_space<vmem>>, vector<1x16x128xbf16>
    %1 = vector.shape_cast %0 : vector<1x16x128xbf16> to vector<16x128xbf16>
    %c0_2 = arith.constant 0 : index
    %c0_3 = arith.constant 0 : index
    %2 = vector.load %arg3[%c0_2, %c0_3] : memref<128x128xbf16, #tpu.memory_space<vmem>>, vector<128x128xbf16>
    %cst = arith.constant dense<0.000000e+00> : vector<16x128xf32>
    %3 = tpu.matmul %1, %2, %cst {dimension_numbers = #tpu.dot_dimension_numbers<[1], [0], [0], [1], [0, 0, 1, 1], [], []>} : vector<16x128xbf16>, vector<128x128xbf16>, vector<16x128xf32> -> vector<16x128xf32>
    %c0_4 = arith.constant 0 : index
    %c0_5 = arith.constant 0 : index
    %4 = vector.load %arg4[%c0_4, %c0_5] : memref<1x128xf32, #tpu.memory_space<vmem>>, vector<1x128xf32>
    %5 = vector.broadcast %4 : vector<1x128xf32> to vector<16x128xf32>
    %6 = arith.addf %3, %5 : vector<16x128xf32>
    %7 = arith.truncf %6 : vector<16x128xf32> to vector<16x128xbf16>
    %c0_6 = arith.constant 0 : index
    %c0_7 = arith.constant 0 : index
    %8 = vector.load %arg5[%c0_6, %c0_7] : memref<128x128xbf16, #tpu.memory_space<vmem>>, vector<128x128xbf16>
    %cst_8 = arith.constant dense<0.000000e+00> : vector<16x128xf32>
    %9 = tpu.matmul %7, %8, %cst_8 {dimension_numbers = #tpu.dot_dimension_numbers<[1], [0], [0], [1], [0, 0, 1, 1], [], []>} : vector<16x128xbf16>, vector<128x128xbf16>, vector<16x128xf32> -> vector<16x128xf32>
    %c0_9 = arith.constant 0 : index
    %c0_10 = arith.constant 0 : index
    %10 = vector.load %arg6[%c0_9, %c0_10] : memref<1x128xf32, #tpu.memory_space<vmem>>, vector<1x128xf32>
    %11 = vector.broadcast %10 : vector<1x128xf32> to vector<16x128xf32>
    %12 = arith.addf %9, %11 : vector<16x128xf32>
    %c0_11 = arith.constant 0 : index
    %c0_12 = arith.constant 0 : index
    %c0_13 = arith.constant 0 : index
    %13 = vector.load %arg7[%c0_11, %c0_12, %c0_13] : memref<1x16x128xf32, #tpu.memory_space<vmem>>, vector<1x16x128xf32>
    %14 = vector.shape_cast %13 : vector<1x16x128xf32> to vector<16x128xf32>
    %15 = vector.shape_cast %12 : vector<16x128xf32> to vector<1x16x128xf32>
    tpu.vector_store %arg7[%c0_11, %c0_12, %c0_13], %15 {strides = array<i32>} : memref<1x16x128xf32, #tpu.memory_space<vmem>>, vector<1x16x128xf32>,
    return
  }
  func.func @transform_0(%arg0: i32, %arg1: i32) -> (i32, i32, i32) {
    %c0_i32 = arith.constant 0 : i32
    %c0_i32_0 = arith.constant 0 : i32
    return %arg0, %arg1, %c0_i32 : i32, i32, i32
  }
  func.func @transform_1(%arg0: i32, %arg1: i32) -> (i32, i32) {
    %c0_i32 = arith.constant 0 : i32
    %c0_i32_0 = arith.constant 0 : i32
    %c0_i32_1 = arith.constant 0 : i32
    return %c0_i32, %c0_i32_0 : i32, i32
  }
  func.func @transform_2(%arg0: i32, %arg1: i32) -> (i32, i32) {
    %c0_i32 = arith.constant 0 : i32
    %c0_i32_0 = arith.constant 0 : i32
    %c0_i32_1 = arith.constant 0 : i32
    return %c0_i32, %c0_i32_0 : i32, i32
  }
  func.func @transform_3(%arg0: i32, %arg1: i32) -> (i32, i32) {
    %c0_i32 = arith.constant 0 : i32
    %c0_i32_0 = arith.constant 0 : i32
    %c0_i32_1 = arith.constant 0 : i32
    return %c0_i32, %c0_i32_0 : i32, i32
  }
  func.func @transform_4(%arg0: i32, %arg1: i32) -> (i32, i32) {
    %c0_i32 = arith.constant 0 : i32
    %c0_i32_0 = arith.constant 0 : i32
    %c0_i32_1 = arith.constant 0 : i32
    return %c0_i32, %c0_i32_0 : i32, i32
  }
  func.func @transform_5(%arg0: i32, %arg1: i32) -> (i32, i32, i32) {
    %c0_i32 = arith.constant 0 : i32
    %c0_i32_0 = arith.constant 0 : i32
    return %arg0, %arg1, %c0_i32 : i32, i32, i32
  }
}

</mosaic_0001>

<llo_original>
// kernel: hybrid_embed.2
$region0: #{hybrid_embed.2}
  #allocation0 [shape = 'u32[]', space=smem, size = 0x4, offset = 0x4, fixed_abs, tag = 'smem constant byte address 0x4 - core index']
  #allocation1 [shape = 'u32[144,128]{1,0:T(1,128)}', space=vmem, size = 0x12000, scoped, tag = 'internal scratch']
  #allocation2 [shape = 'u32[2048]{0}', space=vmem, size = 0x2000, scoped, tag = 'scoped memory for hybrid_embed.2']
  #allocation3 [shape = 'u32[2048]{0}', space=vmem, size = 0x2000, scoped, tag = 'scoped memory for hybrid_embed.2']
  #allocation4 [shape = 'u32[2048]{0}', space=vmem, size = 0x2000, scoped, tag = 'scoped memory for hybrid_embed.2']
  #allocation5 [shape = 'u32[2048]{0}', space=vmem, size = 0x2000, scoped, tag = 'scoped memory for hybrid_embed.2']
  #allocation6 [shape = 'u32[2048]{0}', space=vmem, size = 0x2000, scoped, tag = 'scoped memory for hybrid_embed.2']
  %s0 = inlined_call_operand.vmem [shape: bf16[128,128], index: 0, kind: input, shape index: {}]
  %s1 = inlined_call_operand.vmem [shape: f32[1,128], index: 1, kind: input, shape index: {}]
  %s2 = inlined_call_operand.vmem [shape: bf16[128,128], index: 2, kind: input, shape index: {}]
  %s3 = inlined_call_operand.vmem [shape: f32[1,128], index: 3, kind: input, shape index: {}]
  %s4 = inlined_call_operand.vmem [shape: bf16[2,16,64], index: 4, kind: input, shape index: {}]
  %s5 = inlined_call_operand.<no memory space> [shape: bf16[], index: 5, kind: input, shape index: {}]
  %s6 = inlined_call_operand.hbm [shape: f32[2,16,128], index: 6, kind: output, shape index: {}]
  %s7 = sld [smem:[#allocation0]]
  $region53: #{hybrid_embed.2} parent=0
    _
  %s9 = ssub.s32 1, %s7
  %s10 = scalar_select 0, %s9, %s7
  %v11 = vstv %s5
  %v12 = vunpack.i.l.bf16 %v11
  %v14 = vunpack.i.h.bf16 %v11
  $region1: #{hybrid_embed.2} parent=0
    #allocation7 [shape = 'u8[16384]{0}', space=vmem, size = 0x4000, scoped, tag = 'output window, operand 0']
    #allocation8 [shape = 's32[2]{0}', space=sflag, size = 0x8, scoped, tag = 'scoped memory for hybrid_embed.2']
    %16 = vsyncpa [#allocation8], 0
    %s17 = scalar_lea.sflag [#allocation8], 1
    %18 = vsyncpa %s17, 0
    loop: start=0, step=1, limit=4
    $region2: #{hybrid_embed.2} parent=1 // loop_pre_header
      _
    $region3: #{hybrid_embed.2} parent=1 // loop_header
      %s20 = sphi 0, %s24
      %p21 = scmp.ge.s32.totalorder %s20, 4
      %s27 = sphi 0, %s39
      %s28 = sphi 0, %s35
      %s29 = sphi 0, %s27
      %s30 = sphi 0, %s28
      %s31 = sphi 0, %s29
      %s32 = sphi 0, %s30
      %s44 = sphi 0, %s46
      %s47 = sphi 0, %s44
      %s48 = sphi 0, %s47
      %s64 = sphi 0, %s48
      %s68 = sphi 0, %s68
      %s70 = sphi 0, %s68
      %s71 = sphi 0, %s70
      %s85 = sphi 0, %s71
      %s89 = sphi 0, %s89
      %s91 = sphi 0, %s89
      %s92 = sphi 0, %s91
      %s106 = sphi 0, %s92
      %s110 = sphi 0, %s110
      %s112 = sphi 0, %s110
      %s113 = sphi 0, %s112
      %s127 = sphi 0, %s113
      %s131 = sphi 0, %s131
      %s133 = sphi 0, %s131
      %s134 = sphi 0, %s133
      %s148 = sphi 0, %s134
      %s156 = sphi 0, %s158
      %s159 = sphi 0, %s156
      %s160 = sphi 0, %s159
      %s176 = sphi 0, %s160
    $region4: #{hybrid_embed.2} parent=1 // loop_header_branch
      %23 = sbr.rel (%p21) target = $region8
    $region5: #{hybrid_embed.2} parent=1 // loop_body
      %s25 = ssub.s32 %s20, 1
      %s26 = ssub.s32 %s20, 2
      %s33 = sadd.s32 1, %s28
      %p34 = scmp.ge.s32.totalorder %s33, 1
      %s35 = scalar_select %p34, 0, %s33
      %s36 = sadd.s32 1, %s27
      %s37 = scalar_select %p34, %s36, %s27
      %p38 = scmp.ge.s32.totalorder %s37, 2
      %s39 = scalar_select %p38, 0, %s37
      %s40 = ssub.s32 %s27, %s39
      %s41 = ssub.s32 %s28, %s35
      %s42 = sor.u32 %s40, %s41
      %p43 = scmp.eq.s32.totalorder %s42, 0
      %s45 = sadd.s32 %s44, 1
      %s46 = scalar_select %p43, %s44, %s45
      %p49 = pneg %p43
      %p50 = scmp.eq.s32.totalorder %s20, 1
      %p51 = por %p49, %p50
      %p52 = scmp.ne.s32.totalorder %s44, %s47
      %p53 = scmp.eq.s32.totalorder %s20, 0
      %p54 = por %p52, %p53
      %p55 = scmp.ne.s32.totalorder %s44, %s47
      %p56 = scmp.eq.s32.totalorder %s25, 1
      %p57 = por %p55, %p56
      %p58 = scmp.ne.s32.totalorder %s47, %s48
      %p59 = scmp.eq.s32.totalorder %s25, 0
      %p60 = por %p58, %p59
      %p61 = scmp.ne.s32.totalorder %s47, %s48
      %p62 = scmp.eq.s32.totalorder %s26, 1
      %p63 = por %p61, %p62
      %p65 = scmp.ne.s32.totalorder %s48, %s64
      %p66 = scmp.eq.s32.totalorder %s26, 0
      %p67 = por %p65, %p66
      %s69 = sadd.s32 %s68, 1
      %p72 = scmp.eq.s32.totalorder %s20, 1
      %p73 = scmp.ne.s32.totalorder %s68, %s70
      %p74 = scmp.eq.s32.totalorder %s20, 0
      %p75 = por %p73, %p74
      %p76 = scmp.ne.s32.totalorder %s68, %s70
      %p77 = scmp.eq.s32.totalorder %s25, 1
      %p78 = por %p76, %p77
      %p79 = scmp.ne.s32.totalorder %s70, %s71
      %p80 = scmp.eq.s32.totalorder %s25, 0
      %p81 = por %p79, %p80
      %p82 = scmp.ne.s32.totalorder %s70, %s71
      %p83 = scmp.eq.s32.totalorder %s26, 1
      %p84 = por %p82, %p83
      %p86 = scmp.ne.s32.totalorder %s71, %s85
      %p87 = scmp.eq.s32.totalorder %s26, 0
      %p88 = por %p86, %p87
      %s90 = sadd.s32 %s89, 1
      %p93 = scmp.eq.s32.totalorder %s20, 1
      %p94 = scmp.ne.s32.totalorder %s89, %s91
      %p95 = scmp.eq.s32.totalorder %s20, 0
      %p96 = por %p94, %p95
      %p97 = scmp.ne.s32.totalorder %s89, %s91
      %p98 = scmp.eq.s32.totalorder %s25, 1
      %p99 = por %p97, %p98
      %p100 = scmp.ne.s32.totalorder %s91, %s92
      %p101 = scmp.eq.s32.totalorder %s25, 0
      %p102 = por %p100, %p101
      %p103 = scmp.ne.s32.totalorder %s91, %s92
      %p104 = scmp.eq.s32.totalorder %s26, 1
      %p105 = por %p103, %p104
      %p107 = scmp.ne.s32.totalorder %s92, %s106
      %p108 = scmp.eq.s32.totalorder %s26, 0
      %p109 = por %p107, %p108
      %s111 = sadd.s32 %s110, 1
      %p114 = scmp.eq.s32.totalorder %s20, 1
      %p115 = scmp.ne.s32.totalorder %s110, %s112
      %p116 = scmp.eq.s32.totalorder %s20, 0
      %p117 = por %p115, %p116
      %p118 = scmp.ne.s32.totalorder %s110, %s112
      %p119 = scmp.eq.s32.totalorder %s25, 1
      %p120 = por %p118, %p119
      %p121 = scmp.ne.s32.totalorder %s112, %s113
      %p122 = scmp.eq.s32.totalorder %s25, 0
      %p123 = por %p121, %p122
      %p124 = scmp.ne.s32.totalorder %s112, %s113
      %p125 = scmp.eq.s32.totalorder %s26, 1
      %p126 = por %p124, %p125
      %p128 = scmp.ne.s32.totalorder %s113, %s127
      %p129 = scmp.eq.s32.totalorder %s26, 0
      %p130 = por %p128, %p129
      %s132 = sadd.s32 %s131, 1
      %p135 = scmp.eq.s32.totalorder %s20, 1
      %p136 = scmp.ne.s32.totalorder %s131, %s133
      %p137 = scmp.eq.s32.totalorder %s20, 0
      %p138 = por %p136, %p137
      %p139 = scmp.ne.s32.totalorder %s131, %s133
      %p140 = scmp.eq.s32.totalorder %s25, 1
      %p141 = por %p139, %p140
      %p142 = scmp.ne.s32.totalorder %s133, %s134
      %p143 = scmp.eq.s32.totalorder %s25, 0
      %p144 = por %p142, %p143
      %p145 = scmp.ne.s32.totalorder %s133, %s134
      %p146 = scmp.eq.s32.totalorder %s26, 1
      %p147 = por %p145, %p146
      %p149 = scmp.ne.s32.totalorder %s134, %s148
      %p150 = scmp.eq.s32.totalorder %s26, 0
      %p151 = por %p149, %p150
      %s152 = ssub.s32 %s27, %s39
      %s153 = ssub.s32 %s28, %s35
      %s154 = sor.u32 %s152, %s153
      %p155 = scmp.eq.s32.totalorder %s154, 0
      %s157 = sadd.s32 %s156, 1
      %s158 = scalar_select %p155, %s156, %s157
      %p161 = pneg %p155
      %p162 = scmp.eq.s32.totalorder %s20, 1
      %p163 = por %p161, %p162
      %p164 = scmp.ne.s32.totalorder %s156, %s159
      %p165 = scmp.eq.s32.totalorder %s20, 0
      %p166 = por %p164, %p165
      %p167 = scmp.ne.s32.totalorder %s156, %s159
      %p168 = scmp.eq.s32.totalorder %s25, 1
      %p169 = por %p167, %p168
      %p170 = scmp.ne.s32.totalorder %s159, %s160
      %p171 = scmp.eq.s32.totalorder %s25, 0
      %p172 = por %p170, %p171
      %p173 = scmp.ne.s32.totalorder %s159, %s160
      %p174 = scmp.eq.s32.totalorder %s26, 1
      %p175 = por %p173, %p174
      %p177 = scmp.ne.s32.totalorder %s160, %s176
      %p178 = scmp.eq.s32.totalorder %s26, 0
      %p179 = por %p177, %p178
      %p180 = scmp.le.s32.totalorder 1, %s20
      %p181 = scmp.lt.s32.totalorder %s20, 3
      %p182 = pnand %p180, %p181
      %p183 = pneg %p182
      // Predicated region
      $region9: #{hybrid_embed.2} parent=5 // pred_check
        _
      $region10: #{hybrid_embed.2} parent=5 // pred_check_branch
        %185 = sbr.rel (%p182) target = $region12
      $region11: #{hybrid_embed.2} parent=5 // pred_region
        %s186 = ssub.s32 %s20, 1
        // Predicated region
        $region13: #{hybrid_embed.2} parent=11 // pred_check
          %p187 = pneg %p81
        $region14: #{hybrid_embed.2} parent=11 // pred_check_branch
          %189 = sbr.rel (%p187) target = $region16
        $region15: #{hybrid_embed.2} parent=11 // pred_region
          _
        $region16: #{hybrid_embed.2} parent=11 // pred_fallthru
          _
        // Predicated region
        $region17: #{hybrid_embed.2} parent=11 // pred_check
          %p190 = pneg %p102
        $region18: #{hybrid_embed.2} parent=11 // pred_check_branch
          %192 = sbr.rel (%p190) target = $region20
        $region19: #{hybrid_embed.2} parent=11 // pred_region
          _
        $region20: #{hybrid_embed.2} parent=11 // pred_fallthru
          _
        // Predicated region
        $region21: #{hybrid_embed.2} parent=11 // pred_check
          %p193 = pneg %p123
        $region22: #{hybrid_embed.2} parent=11 // pred_check_branch
          %195 = sbr.rel (%p193) target = $region24
        $region23: #{hybrid_embed.2} parent=11 // pred_region
          _
        $region24: #{hybrid_embed.2} parent=11 // pred_fallthru
          _
        // Predicated region
        $region25: #{hybrid_embed.2} parent=11 // pred_check
          %p196 = pneg %p144
        $region26: #{hybrid_embed.2} parent=11 // pred_check_branch
          %198 = sbr.rel (%p196) target = $region28
        $region27: #{hybrid_embed.2} parent=11 // pred_region
          _
        $region28: #{hybrid_embed.2} parent=11 // pred_fallthru
          _
      $region12: #{hybrid_embed.2} parent=5 // pred_fallthru
        _
      %p199 = scmp.lt.s32.totalorder %s20, 2
      // Predicated region
      $region29: #{hybrid_embed.2} parent=5 // pred_check
        %p200 = pneg %p199
      $region30: #{hybrid_embed.2} parent=5 // pred_check_branch
        %202 = sbr.rel (%p200) target = $region32
      $region31: #{hybrid_embed.2} parent=5 // pred_region
        // Predicated region
        $region33: #{hybrid_embed.2} parent=31 // pred_check
          %p203 = pneg %p54
        $region34: #{hybrid_embed.2} parent=31 // pred_check_branch
          %205 = sbr.rel (%p203) target = $region36
        $region35: #{hybrid_embed.2} parent=31 // pred_region
          %s206 = smul.u32 2, %s28
          %p207 = scmp.lt.s32.totalorder %s27, 1
          %s208 = scalar_select %p207, %s27, 1
          %p209 = scmp.lt.s32.totalorder %s206, 1
          %s210 = scalar_select %p209, %s206, 1
          %s211 = smul.addr %s208, 2
          %s212 = sadd.s32 %s210, %s211
          %s213 = smul.addr %s212, 4
          %s214 = scalar_lea.vmem %s4, %s213
          %s215 = smul.u32 2, %s28
        $region36: #{hybrid_embed.2} parent=31 // pred_fallthru
          _
      $region32: #{hybrid_embed.2} parent=5 // pred_fallthru
        _
      %p216 = scmp.le.s32.totalorder 1, %s20
      %p217 = scmp.lt.s32.totalorder %s20, 3
      %p218 = pnand %p216, %p217
      %p219 = pneg %p218
      // Predicated region
      $region37: #{hybrid_embed.2} parent=5 // pred_check
        _
      $region38: #{hybrid_embed.2} parent=5 // pred_check_branch
        %221 = sbr.rel (%p218) target = $region40
      $region39: #{hybrid_embed.2} parent=5 // pred_region
        #allocation9 [shape = 'u8[4096]{0}', space=vmem, size = 0x1000, dematerialized = true, scoped, tag = 'FusionAdapter Buffer %fusion.1 = bf16[2,16,128]{2,1,0:T(8,128)(2,1)} fusion(%param_4.1, %param_5), kind=kLoop, calls=%fused_computation.2.clone, metadata={op_name="jit(hybrid_embed)/jit(_pad)/pad" stack_frame_id=9}']
        %s222 = ssub.s32 %s20, 1
        %s223 = smul.u32 2, %s30
        %p224 = scmp.lt.s32.totalorder %s29, 1
        %s225 = scalar_select %p224, %s29, 1
        %p226 = scmp.lt.s32.totalorder %s223, 1
        %s227 = scalar_select %p226, %s223, 1
        %s228 = smul.addr %s225, 2
        %s229 = sadd.s32 %s227, %s228
        %s230 = smul.addr %s229, 4
        %s231 = scalar_lea.vmem %s4, %s230
        %p232 = pneg %p60
        %p233 = pneg %p57
        %p234 = pneg %p81
        %p235 = pneg %p78
        %p236 = pneg %p102
        %p237 = pneg %p99
        %p238 = pneg %p123
        %p239 = pneg %p120
        %p240 = pneg %p144
        %p241 = pneg %p141
        %p242 = pneg %p172
        %p243 = pneg %p169
        %s244 = sand.u32 %s159, 1
        %s245 = scalar_lea.sflag [#allocation8], %s244
        %s246 = sand.u32 %s159, 1
        %s247 = smul.addr %s246, 16
        %s248 = scalar_lea.vmem [#allocation7], %s247
        %s249 = smul.u32 2, %s30
        %p250 = scmp.lt.s32.totalorder %s29, 1
        %s251 = scalar_select %p250, %s29, 1
        %p252 = scmp.lt.s32.totalorder %s249, 1
        %s253 = scalar_select %p252, %s249, 1
        %s254 = smul.addr %s251, 2
        %s255 = sadd.s32 %s253, %s254
        %s256 = smul.addr %s255, 4
        %s257 = scalar_lea.vmem %s4, %s256
        %s258 = smul.u32 2, %s30
        %s259 = smul.u32 2, %s30
        %s261 = sor.u32 255, 127
        %s262 = sand.u32 %s261, 85
        %s263 = sshrl.u32 %s262, 1
        %s264 = sor.u32 %s262, %s263
        %s265 = sand.u32 51, %s264
        %s266 = sshrl.u32 %s265, 2
        %s267 = sor.u32 %s265, %s266
        %s268 = sand.u32 15, %s267
        %v269 = vld [vmem:[%s257] sm:%s268]
        %v270 = vunpack.c.l.bf16 %v269
        %v271 = vunpack.c.h.bf16 %v269
        %v272 = vlaneseq
        %v273 = vand.u32 %v272, 127
        %vm275 = vcmp.lt.s32.totalorder %v273, 64
        %v276 = vsel %vm275, %v270, %v12
        %v277 = vpack.c.bf16 0.0, %v276
        %s279 = ssub.s32 16, 1
        %280 = vst [vmem:[#allocation9] sm:%s279] %v277
        %s281 = scalar_lea.vmem %s257, 4
        %s283 = sor.u32 255, 127
        %s284 = sand.u32 %s283, 85
        %s285 = sshrl.u32 %s284, 1
        %s286 = sor.u32 %s284, %s285
        %s287 = sand.u32 51, %s286
        %s288 = sshrl.u32 %s287, 2
        %s289 = sor.u32 %s287, %s288
        %s290 = sand.u32 15, %s289
        %v291 = vld [vmem:[%s281] sm:%s290]
        %v292 = vunpack.c.l.bf16 %v291
        %v293 = vunpack.c.h.bf16 %v291
        %v294 = vlaneseq
        %v295 = vand.u32 %v294, 127
        %vm297 = vcmp.lt.s32.totalorder %v295, 64
        %v298 = vsel %vm297, %v292, %v12
        %s299 = scalar_lea.vmem [#allocation9], 4
        %v300 = vpack.c.bf16 0.0, %v298
        %s302 = ssub.s32 16, 1
        %303 = vst [vmem:[%s299] sm:%s302] %v300
        %v305 = vld [vmem:[#allocation9] sm:$0xf]
        %v306 = vld [vmem:[#allocation9 + $0x4] sm:$0xf]
        %v307 = vld [vmem:[%s0] sm:$0xf]
        %v308 = vld [vmem:[%s0 + $0x4] sm:$0xf]
        %v309 = vld [vmem:[%s0 + $0x8] sm:$0xf]
        %v310 = vld [vmem:[%s0 + $0xc] sm:$0xf]
        %v311 = vld [vmem:[%s0 + $0x10] sm:$0xf]
        %v312 = vld [vmem:[%s0 + $0x14] sm:$0xf]
        %v313 = vld [vmem:[%s0 + $0x18] sm:$0xf]
        %v314 = vld [vmem:[%s0 + $0x1c] sm:$0xf]
        %v315 = vld [vmem:[%s0 + $0x20] sm:$0xf]
        %v316 = vld [vmem:[%s0 + $0x24] sm:$0xf]
        %v317 = vld [vmem:[%s0 + $0x28] sm:$0xf]
        %v318 = vld [vmem:[%s0 + $0x2c] sm:$0xf]
        %v319 = vld [vmem:[%s0 + $0x30] sm:$0xf]
        %v320 = vld [vmem:[%s0 + $0x34] sm:$0xf]
        %v321 = vld [vmem:[%s0 + $0x38] sm:$0xf]
        %v322 = vld [vmem:[%s0 + $0x3c] sm:$0xf]
        %v323 = vld [vmem:[%s1] sm:$0x1]
        %v325 = vlaneseq
        %v326 = vshrl.u32 %v325, 7
        %v327 = vsub.s32 0, %v326
        %v328 = vrot.slane %v323, %v327
        %v332 = vunpack.c.l.b16 %v305
        %v333 = vunpack.c.l.b16 %v306
        %v334 = vpack.c.b16 %v333, %v332
        %v352 = vunpack.c.l.b16 %v307
        %v353 = vunpack.c.l.b16 %v308
        %v354 = vunpack.c.l.b16 %v309
        %v355 = vunpack.c.l.b16 %v310
        %v356 = vunpack.c.l.b16 %v311
        %v357 = vunpack.c.l.b16 %v312
        %v358 = vunpack.c.l.b16 %v313
        %v359 = vunpack.c.l.b16 %v314
        %v360 = vunpack.c.l.b16 %v315
        %v361 = vunpack.c.l.b16 %v316
        %v362 = vunpack.c.l.b16 %v317
        %v363 = vunpack.c.l.b16 %v318
        %v364 = vunpack.c.l.b16 %v319
        %v365 = vunpack.c.l.b16 %v320
        %v366 = vunpack.c.l.b16 %v321
        %v367 = vunpack.c.l.b16 %v322
        %v368 = vpack.c.b16 %v353, %v352
        %v369 = vpack.c.b16 %v355, %v354
        %v370 = vpack.c.b16 %v357, %v356
        %v371 = vpack.c.b16 %v359, %v358
        %v372 = vpack.c.b16 %v361, %v360
        %v373 = vpack.c.b16 %v363, %v362
        %v374 = vpack.c.b16 %v365, %v364
        %v375 = vpack.c.b16 %v367, %v366
        %384 = vmatprep.subr.bf16.mxu0 0
        %385 = vmatpush1.bf16.msra.mxu0 %v375
        %386 = vmatprep.subr.bf16.mxu0 0
        %387 = vmatpush1.bf16.msra.mxu0 %v374
        %388 = vmatprep.subr.bf16.mxu0 0
        %389 = vmatpush1.bf16.msra.mxu0 %v373
        %390 = vmatprep.subr.bf16.mxu0 0
        %391 = vmatpush1.bf16.msra.mxu0 %v372
        %392 = vmatprep.subr.bf16.mxu0 0
        %393 = vmatpush1.bf16.msra.mxu0 %v371
        %394 = vmatprep.subr.bf16.mxu0 0
        %395 = vmatpush1.bf16.msra.mxu0 %v370
        %396 = vmatprep.subr.bf16.mxu0 0
        %397 = vmatpush1.bf16.msra.mxu0 %v369
        %398 = vmatprep.subr.bf16.mxu0 0
        %399 = vmatpush1.bf16.msra.mxu0 %v368
        %400 = vmatprep.subr.bf16.mxu0 0
        %401 = vmatpush2.bf16.msra.mxu0 0
        %402 = vmatprep.subr.bf16.mxu0 0
        %403 = vmatpush2.bf16.msra.mxu0 0
        %404 = vmatprep.subr.bf16.mxu0 0
        %405 = vmatpush2.bf16.msra.mxu0 0
        %406 = vmatprep.subr.bf16.mxu0 0
        %407 = vmatpush2.bf16.msra.mxu0 0
        %408 = vmatprep.subr.bf16.mxu0 0
        %409 = vmatpush2.bf16.msra.mxu0 0
        %410 = vmatprep.subr.bf16.mxu0 0
        %411 = vmatpush2.bf16.msra.mxu0 0
        %412 = vmatprep.subr.bf16.mxu0 0
        %413 = vmatpush2.bf16.msra.mxu0 0
        %414 = vmatprep.subr.bf16.mxu0 0
        %415 = vmatpush2.bf16.msra.mxu0 0
        %416 = vmatprep.mubr.bf16.mxu0 0
        %417 = vmatmul.mubr.bf16.gmra.mxu0 %v334
        %v418 = vpop.f32.mrf.mxu0
        %v419 = vadd.f32 %v328, %v418
        %v420 = vpop.f32.mrf.mxu0
        %v421 = vpop.f32.mrf.mxu0
        %v422 = vadd.f32 %v328, %v421
        %v423 = vpop.f32.mrf.mxu0
        %424 = vdwg.mxu0
        %v425 = vpack.c.bf16 %v422, %v419
        %v426 = vld [vmem:[%s2] sm:$0xf]
        %v427 = vld [vmem:[%s2 + $0x4] sm:$0xf]
        %v428 = vld [vmem:[%s2 + $0x8] sm:$0xf]
        %v429 = vld [vmem:[%s2 + $0xc] sm:$0xf]
        %v430 = vld [vmem:[%s2 + $0x10] sm:$0xf]
        %v431 = vld [vmem:[%s2 + $0x14] sm:$0xf]
        %v432 = vld [vmem:[%s2 + $0x18] sm:$0xf]
        %v433 = vld [vmem:[%s2 + $0x1c] sm:$0xf]
        %v434 = vld [vmem:[%s2 + $0x20] sm:$0xf]
        %v435 = vld [vmem:[%s2 + $0x24] sm:$0xf]
        %v436 = vld [vmem:[%s2 + $0x28] sm:$0xf]
        %v437 = vld [vmem:[%s2 + $0x2c] sm:$0xf]
        %v438 = vld [vmem:[%s2 + $0x30] sm:$0xf]
        %v439 = vld [vmem:[%s2 + $0x34] sm:$0xf]
        %v440 = vld [vmem:[%s2 + $0x38] sm:$0xf]
        %v441 = vld [vmem:[%s2 + $0x3c] sm:$0xf]
        %v442 = vld [vmem:[%s3] sm:$0x1]
        %v444 = vlaneseq
        %v445 = vshrl.u32 %v444, 7
        %v446 = vsub.s32 0, %v445
        %v447 = vrot.slane %v442, %v446
        %v465 = vunpack.c.l.b16 %v426
        %v466 = vunpack.c.l.b16 %v427
        %v467 = vunpack.c.l.b16 %v428
        %v468 = vunpack.c.l.b16 %v429
        %v469 = vunpack.c.l.b16 %v430
        %v470 = vunpack.c.l.b16 %v431
        %v471 = vunpack.c.l.b16 %v432
        %v472 = vunpack.c.l.b16 %v433
        %v473 = vunpack.c.l.b16 %v434
        %v474 = vunpack.c.l.b16 %v435
        %v475 = vunpack.c.l.b16 %v436
        %v476 = vunpack.c.l.b16 %v437
        %v477 = vunpack.c.l.b16 %v438
        %v478 = vunpack.c.l.b16 %v439
        %v479 = vunpack.c.l.b16 %v440
        %v480 = vunpack.c.l.b16 %v441
        %v481 = vpack.c.b16 %v466, %v465
        %v482 = vpack.c.b16 %v468, %v467
        %v483 = vpack.c.b16 %v470, %v469
        %v484 = vpack.c.b16 %v472, %v471
        %v485 = vpack.c.b16 %v474, %v473
        %v486 = vpack.c.b16 %v476, %v475
        %v487 = vpack.c.b16 %v478, %v477
        %v488 = vpack.c.b16 %v480, %v479
        %497 = vmatprep.subr.bf16.mxu0 0
        %498 = vmatpush1.bf16.msra.mxu0 %v488
        %499 = vmatprep.subr.bf16.mxu0 0
        %500 = vmatpush1.bf16.msra.mxu0 %v487
        %501 = vmatprep.subr.bf16.mxu0 0
        %502 = vmatpush1.bf16.msra.mxu0 %v486
        %503 = vmatprep.subr.bf16.mxu0 0
        %504 = vmatpush1.bf16.msra.mxu0 %v485
        %505 = vmatprep.subr.bf16.mxu0 0
        %506 = vmatpush1.bf16.msra.mxu0 %v484
        %507 = vmatprep.subr.bf16.mxu0 0
        %508 = vmatpush1.bf16.msra.mxu0 %v483
        %509 = vmatprep.subr.bf16.mxu0 0
        %510 = vmatpush1.bf16.msra.mxu0 %v482
        %511 = vmatprep.subr.bf16.mxu0 0
        %512 = vmatpush1.bf16.msra.mxu0 %v481
        %513 = vmatprep.subr.bf16.mxu0 0
        %514 = vmatpush2.bf16.msra.mxu0 0
        %515 = vmatprep.subr.bf16.mxu0 0
        %516 = vmatpush2.bf16.msra.mxu0 0
        %517 = vmatprep.subr.bf16.mxu0 0
        %518 = vmatpush2.bf16.msra.mxu0 0
        %519 = vmatprep.subr.bf16.mxu0 0
        %520 = vmatpush2.bf16.msra.mxu0 0
        %521 = vmatprep.subr.bf16.mxu0 0
        %522 = vmatpush2.bf16.msra.mxu0 0
        %523 = vmatprep.subr.bf16.mxu0 0
        %524 = vmatpush2.bf16.msra.mxu0 0
        %525 = vmatprep.subr.bf16.mxu0 0
        %526 = vmatpush2.bf16.msra.mxu0 0
        %527 = vmatprep.subr.bf16.mxu0 0
        %528 = vmatpush2.bf16.msra.mxu0 0
        %529 = vmatprep.mubr.bf16.mxu0 0
        %530 = vmatmul.mubr.bf16.gmra.mxu0 %v425
        %v531 = vpop.f32.mrf.mxu0
        %v532 = vadd.f32 %v447, %v531
        %v533 = vpop.f32.mrf.mxu0
        %v534 = vpop.f32.mrf.mxu0
        %v535 = vadd.f32 %v447, %v534
        %v536 = vpop.f32.mrf.mxu0
        %537 = vdwg.mxu0
        %538 = vst [vmem:[%s248] sm:$0xff] %v532
        %539 = vst [vmem:[%s248 + $0x8] sm:$0xff] %v535
        %s540 = sand.u32 %s159, 1
        %s541 = scalar_lea.sflag [#allocation8], %s540
        %s542 = sand.u32 %s159, 1
        %s543 = smul.addr %s542, 16
        %s544 = scalar_lea.vmem [#allocation7], %s543
        // Predicated region
        $region41: #{hybrid_embed.2} parent=39 // pred_check
          %p545 = pneg %p169
        $region42: #{hybrid_embed.2} parent=39 // pred_check_branch
          %547 = sbr.rel (%p545) target = $region44
        $region43: #{hybrid_embed.2} parent=39 // pred_region
          %s548 = smul.u32 2, %s30
          %s550 = ssub.s32 256, 256
          %551 = vsyncadd %s541, %s550
          %s552 = smul.addr %s29, 2
          %s553 = sadd.s32 %s548, %s552
          %s554 = smul.addr %s553, 128
          %s555 = scalar_lea.hbm %s6, %s554
          %s556 = sshll.u32 %s544, 4
          %s557 = int_to_ptr.vmem [resolvable:$true] %s556
          %562 = dma.vmem_to_hbm [thread:$0]  %s557, 256, %s555, %s541, 128, 128, 8
        $region44: #{hybrid_embed.2} parent=39 // pred_fallthru
          _
      $region40: #{hybrid_embed.2} parent=5 // pred_fallthru
        _
      %p563 = scmp.le.s32.totalorder 2, %s20
      // Predicated region
      $region45: #{hybrid_embed.2} parent=5 // pred_check
        %p564 = pneg %p563
      $region46: #{hybrid_embed.2} parent=5 // pred_check_branch
        %566 = sbr.rel (%p564) target = $region48
      $region47: #{hybrid_embed.2} parent=5 // pred_region
        %s567 = ssub.s32 %s20, 2
        // Predicated region
        $region49: #{hybrid_embed.2} parent=47 // pred_check
          %p568 = pneg %p175
        $region50: #{hybrid_embed.2} parent=47 // pred_check_branch
          %570 = sbr.rel (%p568) target = $region52
        $region51: #{hybrid_embed.2} parent=47 // pred_region
          %s571 = sand.u32 %s160, 1
          %s572 = scalar_lea.sflag [#allocation8], %s571
          %s573 = sand.u32 %s160, 1
          %s574 = smul.addr %s573, 16
          %s575 = scalar_lea.vmem [#allocation7], %s574
          %576 = dma.done %s572, 256
        $region52: #{hybrid_embed.2} parent=47 // pred_fallthru
          _
      $region48: #{hybrid_embed.2} parent=5 // pred_fallthru
        _
    $region6: #{hybrid_embed.2} parent=1 // loop_footer
      %s24 = sadd.s32 1, %s20
    $region7: #{hybrid_embed.2} parent=1 // loop_footer_branch
      %19 = sbr.rel target = $region3
    $region8: #{hybrid_embed.2} parent=1 // loop_exit
      _
    %577 = vsyncpa [#allocation8], 1
    %s578 = scalar_lea.sflag [#allocation8], 1
    %579 = vsyncpa %s578, 1

</llo_original>
